<compile_context>
chip_gen: v5e
topology: v5e:2x2
jax: 0.10.0
libtpu: 0.0.40
codegen_flags: <defaults>
</compile_context>

<pallas_src>
import jax
import jax.numpy as jnp
from jax.experimental import pallas as pl
from jax.experimental.pallas import tpu as pltpu

H1, H2, H3 = 128, 64, 32   # true hidden widths of ClinicalMLP
HP = 128                   # lane-dense padded width for the hidden layers


def _round_up(n, m):
    return (n + m - 1) // m * m


def mlp_kernel(x_ref, w1_ref, b1_ref, w2_ref, b2_ref, w3_ref, b3_ref, o_ref):
    # Fused 3-layer MLP, ReLU after every layer (matches the PyTorch forward).
    # MXU operands are bf16, accumulation is f32; bias + ReLU are f32.
    x = x_ref[...].astype(jnp.bfloat16)                          # in-kernel cast
    h1 = jnp.dot(x, w1_ref[...], preferred_element_type=jnp.float32)
    h1 = jnp.maximum(h1 + b1_ref[...], 0.0)                      # (tm, 128) f32

    h2 = jnp.dot(h1.astype(jnp.bfloat16), w2_ref[...],
                 preferred_element_type=jnp.float32)
    h2 = jnp.maximum(h2 + b2_ref[...], 0.0)                      # (tm, 128) f32
    # Padded columns (64:128) stay exactly 0: zero weights + zero bias + ReLU.

    h3 = jnp.dot(h2.astype(jnp.bfloat16), w3_ref[...],
                 preferred_element_type=jnp.float32)
    h3 = jnp.maximum(h3 + b3_ref[...], 0.0)                      # (tm, 32) f32

    o_ref[...] = h3.astype(o_ref.dtype)                          # narrow 32-col store


def clinical_mlp(x, kparams, *, tm_max=4096):
    """x: [B, n_clinical_vars] float32.  kparams: padded/bf16 kernel params.

    Returns [B, 32] float32 (= relu(fc3(relu(fc2(relu(fc1(x)))))))."""
    B, D = x.shape

    # Tile selection: bound padding waste and keep enough grid steps for
    # pipelining / 2-TC sharding on v7x.
    n_steps = max(pl.cdiv(B, tm_max), 1)
    if n_steps == 1 and B >= 2048:
        n_steps = 2                       # v7x: keep both TensorCores busy
    tm = _round_up(pl.cdiv(B, n_steps), 8)
    Bp = n_steps * tm

    if Bp != B:
        # Only pad when the batch is not already tile-aligned; padded rows are
        # sliced off below.
        x = jnp.pad(x, ((0, Bp - B), (0, 0)))

    w1, b1 = kparams["w1"], kparams["b1"]
    w2, b2 = kparams["w2"], kparams["b2"]
    w3, b3 = kparams["w3"], kparams["b3"]

    # VMEM budget: x/out double buffers + compiler-managed f32/bf16
    # intermediates + resident weights (2x headroom, capped for v7x's 64 MiB).
    weight_bytes = (D * HP * 2 + HP * HP * 2 + HP * H3 * 2      # bf16 weights
                    + 2 * HP * 4 + H3 * 4)                      # f32 biases
    per_row = (2 * 4 * D          # x f32 tile, double buffered
               + 2 * 4 * H3       # out f32 tile, double buffered
               + 3 * 4 * HP       # h1/h2/h3 f32 intermediates
               + 2 * 2 * HP)      # bf16 temps
    vmem_bytes = min(max(2 * (tm * per_row + 2 * weight_bytes), 32 << 20),
                     48 << 20)

    flops = 2 * Bp * (D * HP + HP * HP + HP * H3)
    bytes_accessed = Bp * (D * 4 + H3 * 4) + weight_bytes

    out = pl.pallas_call(
        mlp_kernel,
        out_shape=jax.ShapeDtypeStruct((Bp, H3), jnp.float32),
        grid_spec=pltpu.PrefetchScalarGridSpec(
            num_scalar_prefetch=0,
            grid=(n_steps,),
            in_specs=[
                pl.BlockSpec((tm, D), lambda i: (i, 0)),    # x batch tile (f32)
                pl.BlockSpec((D, HP), lambda i: (0, 0)),    # w1 (resident, bf16)
                pl.BlockSpec((1, HP), lambda i: (0, 0)),    # b1 (f32)
                pl.BlockSpec((HP, HP), lambda i: (0, 0)),   # w2 padded 128x128
                pl.BlockSpec((1, HP), lambda i: (0, 0)),    # b2
                pl.BlockSpec((HP, H3), lambda i: (0, 0)),   # w3 padded rows, 32 cols
                pl.BlockSpec((1, H3), lambda i: (0, 0)),    # b3
            ],
            out_specs=pl.BlockSpec((tm, H3), lambda i: (i, 0)),
        ),
        compiler_params=pltpu.CompilerParams(
            dimension_semantics=("parallel",),     # batch axis -> 2 TCs on v7x
            vmem_limit_bytes=int(vmem_bytes),
        ),
        cost_estimate=pl.CostEstimate(
            flops=int(flops), transcendentals=0,
            bytes_accessed=int(bytes_accessed)),
    )(x, w1, b1, w2, b2, w3, b3)

    return out[:B] if Bp != B else out


def init_params(key, n_clinical_vars):
    """Deterministic synthetic f32 parameters (shapes from ClinicalMLP.__init__)."""
    k1, k2, k3, k4, k5, k6 = jax.random.split(key, 6)

    def lin(kw, kb, fan_in, fan_out):
        bound = 1.0 / jnp.sqrt(fan_in)
        w = jax.random.uniform(kw, (fan_in, fan_out), jnp.float32, -bound, bound)
        b = jax.random.uniform(kb, (1, fan_out), jnp.float32, -bound, bound)
        return w, b

    w1, b1 = lin(k1, k2, n_clinical_vars, H1)
    w2, b2 = lin(k3, k4, H1, H2)
    w3, b3 = lin(k5, k6, H2, H3)
    return {"w1": w1, "b1": b1, "w2": w2, "b2": b2, "w3": w3, "b3": b3}


def prepare_kernel_params(params):
    """Zero-pad hidden widths to 128 lanes, keep the 32-wide output narrow,
    cast weights to bf16 (biases stay f32)."""
    def pad_cols(a, n):
        return jnp.pad(a, ((0, 0), (0, n - a.shape[1])))

    def pad_rows(a, n):
        return jnp.pad(a, ((0, n - a.shape[0]), (0, 0)))

    w1 = pad_cols(params["w1"], HP).astype(jnp.bfloat16)       # (D, 128)
    b1 = pad_cols(params["b1"], HP)                            # (1, 128) f32
    w2 = pad_cols(params["w2"], HP).astype(jnp.bfloat16)       # (128, 128)
    b2 = pad_cols(params["b2"], HP)                            # (1, 128) f32
    w3 = pad_rows(params["w3"], HP).astype(jnp.bfloat16)       # (128, 32)
    b3 = params["b3"]                                          # (1, 32) f32
    return {"w1": w1, "b1": b1, "w2": w2, "b2": b2, "w3": w3, "b3": b3}


def reference_mlp(x, p):
    # Pure f32 JAX reference matching the PyTorch forward.
    h = jnp.maximum(x @ p["w1"] + p["b1"], 0.0)
    h = jnp.maximum(h @ p["w2"] + p["b2"], 0.0)
    h = jnp.maximum(h @ p["w3"] + p["b3"], 0.0)
    return h


if __name__ == "__main__":
    key = jax.random.PRNGKey(0)
    kx, kx2, kp = jax.random.split(key, 3)

    n_clinical_vars = 16
    params = init_params(kp, n_clinical_vars)
    kparams = prepare_kernel_params(params)

    # Test 1: small aligned batch (single grid step, no row padding).
    batch = 8
    x = jax.random.normal(kx, (batch, n_clinical_vars), jnp.float32)
    out = jax.block_until_ready(clinical_mlp(x, kparams))
    ref = reference_mlp(x, params)
    assert out.shape == (batch, H3)
    max_err = float(jnp.max(jnp.abs(out - ref)))
    assert jnp.allclose(out, ref, atol=2e-2, rtol=2e-2), (
        f"mismatch vs reference (B=8), max abs err = {max_err}")

    # Test 2: non-aligned batch with a tiny tile cap to exercise the
    # multi-step grid, row padding, and the final row slice.
    batch2 = 20
    x2 = jax.random.normal(kx2, (batch2, n_clinical_vars), jnp.float32)
    out2 = jax.block_until_ready(clinical_mlp(x2, kparams, tm_max=8))
    ref2 = reference_mlp(x2, params)
    assert out2.shape == (batch2, H3)
    max_err2 = float(jnp.max(jnp.abs(out2 - ref2)))
    assert jnp.allclose(out2, ref2, atol=2e-2, rtol=2e-2), (
        f"mismatch vs reference (B=20 multi-step), max abs err = {max_err2}")

    print("KERNEL_OK")
</pallas_src>

<mosaic_0001>
module attributes {stable_mosaic.version = 11 : i64} {
  func.func @mlp_kernel(%arg0: i32, %arg1: memref<8x16xf32, #tpu.memory_space<vmem>>, %arg2: memref<16x128xbf16, #tpu.memory_space<vmem>>, %arg3: memref<1x128xf32, #tpu.memory_space<vmem>>, %arg4: memref<128x128xbf16, #tpu.memory_space<vmem>>, %arg5: memref<1x128xf32, #tpu.memory_space<vmem>>, %arg6: memref<128x32xbf16, #tpu.memory_space<vmem>>, %arg7: memref<1x32xf32, #tpu.memory_space<vmem>>, %arg8: memref<8x32xf32, #tpu.memory_space<vmem>>) attributes {dimension_semantics = [#tpu.dimension_semantics<parallel>], iteration_bounds = array<i64: 1>, scalar_prefetch = 0 : i64, scratch_operands = 0 : i64, tpu.core_type = #tpu.core_type<tc>, window_params = [{transform_indices = @transform_0, window_bounds = array<i64: 8, 16>}, {pipeline_mode = #tpu.pipeline_mode<synchronous>, transform_indices = @transform_1, window_bounds = array<i64: 16, 128>}, {pipeline_mode = #tpu.pipeline_mode<synchronous>, transform_indices = @transform_2, window_bounds = array<i64: 1, 128>}, {pipeline_mode = #tpu.pipeline_mode<synchronous>, transform_indices = @transform_3, window_bounds = array<i64: 128, 128>}, {pipeline_mode = #tpu.pipeline_mode<synchronous>, transform_indices = @transform_4, window_bounds = array<i64: 1, 128>}, {pipeline_mode = #tpu.pipeline_mode<synchronous>, transform_indices = @transform_5, window_bounds = array<i64: 128, 32>}, {pipeline_mode = #tpu.pipeline_mode<synchronous>, transform_indices = @transform_6, window_bounds = array<i64: 1, 32>}, {transform_indices = @transform_7, window_bounds = array<i64: 8, 32>}]} {
    %c0 = arith.constant 0 : index
    %c0_0 = arith.constant 0 : index
    %0 = vector.load %arg1[%c0, %c0_0] : memref<8x16xf32, #tpu.memory_space<vmem>>, vector<8x16xf32>
    %1 = arith.truncf %0 : vector<8x16xf32> to vector<8x16xbf16>
    %c0_1 = arith.constant 0 : index
    %c0_2 = arith.constant 0 : index
    %2 = vector.load %arg2[%c0_1, %c0_2] : memref<16x128xbf16, #tpu.memory_space<vmem>>, vector<16x128xbf16>
    %cst = arith.constant dense<0.000000e+00> : vector<8x128xf32>
    %3 = tpu.matmul %1, %2, %cst {dimension_numbers = #tpu.dot_dimension_numbers<[1], [0], [0], [1], [0, 0, 1, 1], [], []>} : vector<8x16xbf16>, vector<16x128xbf16>, vector<8x128xf32> -> vector<8x128xf32>
    %c0_3 = arith.constant 0 : index
    %c0_4 = arith.constant 0 : index
    %4 = vector.load %arg3[%c0_3, %c0_4] : memref<1x128xf32, #tpu.memory_space<vmem>>, vector<1x128xf32>
    %5 = vector.broadcast %4 : vector<1x128xf32> to vector<8x128xf32>
    %6 = arith.addf %3, %5 : vector<8x128xf32>
    %cst_5 = arith.constant 0.000000e+00 : f32
    %7 = vector.broadcast %cst_5 : f32 to vector<8x128xf32>
    %8 = arith.maximumf %6, %7 : vector<8x128xf32>
    %9 = arith.truncf %8 : vector<8x128xf32> to vector<8x128xbf16>
    %c0_6 = arith.constant 0 : index
    %c0_7 = arith.constant 0 : index
    %10 = vector.load %arg4[%c0_6, %c0_7] : memref<128x128xbf16, #tpu.memory_space<vmem>>, vector<128x128xbf16>
    %cst_8 = arith.constant dense<0.000000e+00> : vector<8x128xf32>
    %11 = tpu.matmul %9, %10, %cst_8 {dimension_numbers = #tpu.dot_dimension_numbers<[1], [0], [0], [1], [0, 0, 1, 1], [], []>} : vector<8x128xbf16>, vector<128x128xbf16>, vector<8x128xf32> -> vector<8x128xf32>
    %c0_9 = arith.constant 0 : index
    %c0_10 = arith.constant 0 : index
    %12 = vector.load %arg5[%c0_9, %c0_10] : memref<1x128xf32, #tpu.memory_space<vmem>>, vector<1x128xf32>
    %13 = vector.broadcast %12 : vector<1x128xf32> to vector<8x128xf32>
    %14 = arith.addf %11, %13 : vector<8x128xf32>
    %cst_11 = arith.constant 0.000000e+00 : f32
    %15 = vector.broadcast %cst_11 : f32 to vector<8x128xf32>
    %16 = arith.maximumf %14, %15 : vector<8x128xf32>
    %17 = arith.truncf %16 : vector<8x128xf32> to vector<8x128xbf16>
    %c0_12 = arith.constant 0 : index
    %c0_13 = arith.constant 0 : index
    %18 = vector.load %arg6[%c0_12, %c0_13] : memref<128x32xbf16, #tpu.memory_space<vmem>>, vector<128x32xbf16>
    %cst_14 = arith.constant dense<0.000000e+00> : vector<8x32xf32>
    %19 = tpu.matmul %17, %18, %cst_14 {dimension_numbers = #tpu.dot_dimension_numbers<[1], [0], [0], [1], [0, 0, 1, 1], [], []>} : vector<8x128xbf16>, vector<128x32xbf16>, vector<8x32xf32> -> vector<8x32xf32>
    %c0_15 = arith.constant 0 : index
    %c0_16 = arith.constant 0 : index
    %20 = vector.load %arg7[%c0_15, %c0_16] : memref<1x32xf32, #tpu.memory_space<vmem>>, vector<1x32xf32>
    %21 = vector.broadcast %20 : vector<1x32xf32> to vector<8x32xf32>
    %22 = arith.addf %19, %21 : vector<8x32xf32>
    %cst_17 = arith.constant 0.000000e+00 : f32
    %23 = vector.broadcast %cst_17 : f32 to vector<8x32xf32>
    %24 = arith.maximumf %22, %23 : vector<8x32xf32>
    %c0_18 = arith.constant 0 : index
    %c0_19 = arith.constant 0 : index
    %25 = vector.load %arg8[%c0_18, %c0_19] : memref<8x32xf32, #tpu.memory_space<vmem>>, vector<8x32xf32>
    tpu.vector_store %arg8[%c0_18, %c0_19], %24 {strides = array<i32>} : memref<8x32xf32, #tpu.memory_space<vmem>>, vector<8x32xf32>,
    return
  }
  func.func @transform_0(%arg0: i32) -> (i32, i32) {
    %c0_i32 = arith.constant 0 : i32
    %c0_i32_0 = arith.constant 0 : i32
    return %arg0, %c0_i32 : i32, i32
  }
  func.func @transform_1(%arg0: i32) -> (i32, i32) {
    %c0_i32 = arith.constant 0 : i32
    %c0_i32_0 = arith.constant 0 : i32
    %c0_i32_1 = arith.constant 0 : i32
    return %c0_i32, %c0_i32_0 : i32, i32
  }
  func.func @transform_2(%arg0: i32) -> (i32, i32) {
    %c0_i32 = arith.constant 0 : i32
    %c0_i32_0 = arith.constant 0 : i32
    %c0_i32_1 = arith.constant 0 : i32
    return %c0_i32, %c0_i32_0 : i32, i32
  }
  func.func @transform_3(%arg0: i32) -> (i32, i32) {
    %c0_i32 = arith.constant 0 : i32
    %c0_i32_0 = arith.constant 0 : i32
    %c0_i32_1 = arith.constant 0 : i32
    return %c0_i32, %c0_i32_0 : i32, i32
  }
  func.func @transform_4(%arg0: i32) -> (i32, i32) {
    %c0_i32 = arith.constant 0 : i32
    %c0_i32_0 = arith.constant 0 : i32
    %c0_i32_1 = arith.constant 0 : i32
    return %c0_i32, %c0_i32_0 : i32, i32
  }
  func.func @transform_5(%arg0: i32) -> (i32, i32) {
    %c0_i32 = arith.constant 0 : i32
    %c0_i32_0 = arith.constant 0 : i32
    %c0_i32_1 = arith.constant 0 : i32
    return %c0_i32, %c0_i32_0 : i32, i32
  }
  func.func @transform_6(%arg0: i32) -> (i32, i32) {
    %c0_i32 = arith.constant 0 : i32
    %c0_i32_0 = arith.constant 0 : i32
    %c0_i32_1 = arith.constant 0 : i32
    return %c0_i32, %c0_i32_0 : i32, i32
  }
  func.func @transform_7(%arg0: i32) -> (i32, i32) {
    %c0_i32 = arith.constant 0 : i32
    %c0_i32_0 = arith.constant 0 : i32
    return %arg0, %c0_i32 : i32, i32
  }
}

</mosaic_0001>

<llo_original>
// kernel: tpu_custom_call.1
$region0: #{tpu_custom_call.1}
  #allocation0 [shape = 'u32[]', space=smem, size = 0x4, offset = 0x4, fixed_abs, tag = 'smem constant byte address 0x4 - core index']
  #allocation1 [shape = 'u32[72,128]{1,0:T(1,128)}', space=vmem, size = 0x9000, scoped, tag = 'internal scratch']
  %s0 = inlined_call_operand.vmem [shape: f32[8,16], index: 0, kind: input, shape index: {}]
  %s1 = inlined_call_operand.vmem [shape: bf16[16,128], index: 1, kind: input, shape index: {}]
  %s2 = inlined_call_operand.vmem [shape: f32[1,128], index: 2, kind: input, shape index: {}]
  %s3 = inlined_call_operand.vmem [shape: bf16[128,128], index: 3, kind: input, shape index: {}]
  %s4 = inlined_call_operand.vmem [shape: f32[1,128], index: 4, kind: input, shape index: {}]
  %s5 = inlined_call_operand.vmem [shape: bf16[128,32], index: 5, kind: input, shape index: {}]
  %s6 = inlined_call_operand.vmem [shape: f32[1,32], index: 6, kind: input, shape index: {}]
  %s7 = inlined_call_operand.hbm [shape: f32[8,32], index: 7, kind: output, shape index: {}]
  %s8 = sld [smem:[#allocation0]]
  $region38: #{tpu_custom_call.1} parent=0
    _
  %s10 = ssub.s32 1, %s8
  %s11 = scalar_select 0, %s10, %s8
  $region1: #{tpu_custom_call.1} parent=0
    #allocation2 [shape = 'u8[4096]{0}', space=vmem, size = 0x1000, scoped, tag = 'output window, operand 0, single buffered']
    #allocation3 [shape = 's32[1]{0}', space=sflag, size = 0x4, scoped, tag = 'scoped memory for tpu_custom_call.1']
    %12 = vsyncpa [#allocation3], 0
    // Predicated region
    $region2: #{tpu_custom_call.1} parent=1 // pred_check
      _
    $region3: #{tpu_custom_call.1} parent=1 // pred_check_branch
      %14 = sbr.rel (0) target = $region5
    $region4: #{tpu_custom_call.1} parent=1 // pred_region
      _
    $region5: #{tpu_custom_call.1} parent=1 // pred_fallthru
      _
    // Predicated region
    $region6: #{tpu_custom_call.1} parent=1 // pred_check
      _
    $region7: #{tpu_custom_call.1} parent=1 // pred_check_branch
      %16 = sbr.rel (0) target = $region9
    $region8: #{tpu_custom_call.1} parent=1 // pred_region
      _
    $region9: #{tpu_custom_call.1} parent=1 // pred_fallthru
      _
    // Predicated region
    $region10: #{tpu_custom_call.1} parent=1 // pred_check
      _
    $region11: #{tpu_custom_call.1} parent=1 // pred_check_branch
      %18 = sbr.rel (0) target = $region13
    $region12: #{tpu_custom_call.1} parent=1 // pred_region
      _
    $region13: #{tpu_custom_call.1} parent=1 // pred_fallthru
      _
    // Predicated region
    $region14: #{tpu_custom_call.1} parent=1 // pred_check
      _
    $region15: #{tpu_custom_call.1} parent=1 // pred_check_branch
      %20 = sbr.rel (0) target = $region17
    $region16: #{tpu_custom_call.1} parent=1 // pred_region
      _
    $region17: #{tpu_custom_call.1} parent=1 // pred_fallthru
      _
    // Predicated region
    $region18: #{tpu_custom_call.1} parent=1 // pred_check
      _
    $region19: #{tpu_custom_call.1} parent=1 // pred_check_branch
      %22 = sbr.rel (0) target = $region21
    $region20: #{tpu_custom_call.1} parent=1 // pred_region
      _
    $region21: #{tpu_custom_call.1} parent=1 // pred_fallthru
      _
    // Predicated region
    $region22: #{tpu_custom_call.1} parent=1 // pred_check
      _
    $region23: #{tpu_custom_call.1} parent=1 // pred_check_branch
      %24 = sbr.rel (0) target = $region25
    $region24: #{tpu_custom_call.1} parent=1 // pred_region
      _
    $region25: #{tpu_custom_call.1} parent=1 // pred_fallthru
      _
    // Predicated region
    $region26: #{tpu_custom_call.1} parent=1 // pred_check
      _
    $region27: #{tpu_custom_call.1} parent=1 // pred_check_branch
      %26 = sbr.rel (0) target = $region29
    $region28: #{tpu_custom_call.1} parent=1 // pred_region
      _
    $region29: #{tpu_custom_call.1} parent=1 // pred_fallthru
      _
    %v28 = vld [vmem:[%s0] sm:$0xff]
    %v29 = vpack.c.bf16 %v28, %v28
    %v30 = vld [vmem:[%s1] sm:$0xf]
    %v31 = vld [vmem:[%s1 + $0x4] sm:$0xf]
    %v32 = vld [vmem:[%s2] sm:$0x1]
    %v34 = vperm.slane %v32, 0
    %v38 = vunpack.c.l.b16 %v30
    %v39 = vunpack.c.l.b16 %v31
    %v40 = vpack.c.b16 %v39, %v38
    %vm42 = vcmask 130048
    %v44 = vsel %vm42, %v29, 0
    %46 = vmatpush.bf16.msra.mxu0 0
    %47 = vmatpush.bf16.msra.mxu0 0
    %48 = vmatpush.bf16.msra.mxu0 0
    %49 = vmatpush.bf16.msra.mxu0 0
    %50 = vmatpush.bf16.msra.mxu0 0
    %51 = vmatpush.bf16.msra.mxu0 0
    %52 = vmatpush.bf16.msra.mxu0 0
    %53 = vmatpush.bf16.msra.mxu0 %v40
    %54 = vmatmul.bf16.gmra.mxu0 %v44
    %v55 = vpop.f32.mrf.mxu0
    %v56 = vadd.f32 %v34, %v55
    %v57 = vpop.f32.mrf.mxu0
    %58 = vdwg.mxu0
    %v59 = vmax.f32 %v56, 0.0
    %v60 = vpack.c.bf16 %v59, %v59
    %v61 = vld [vmem:[%s3] sm:$0xf]
    %v62 = vld [vmem:[%s3 + $0x4] sm:$0xf]
    %v63 = vld [vmem:[%s3 + $0x8] sm:$0xf]
    %v64 = vld [vmem:[%s3 + $0xc] sm:$0xf]
    %v65 = vld [vmem:[%s3 + $0x10] sm:$0xf]
    %v66 = vld [vmem:[%s3 + $0x14] sm:$0xf]
    %v67 = vld [vmem:[%s3 + $0x18] sm:$0xf]
    %v68 = vld [vmem:[%s3 + $0x1c] sm:$0xf]
    %v69 = vld [vmem:[%s3 + $0x20] sm:$0xf]
    %v70 = vld [vmem:[%s3 + $0x24] sm:$0xf]
    %v71 = vld [vmem:[%s3 + $0x28] sm:$0xf]
    %v72 = vld [vmem:[%s3 + $0x2c] sm:$0xf]
    %v73 = vld [vmem:[%s3 + $0x30] sm:$0xf]
    %v74 = vld [vmem:[%s3 + $0x34] sm:$0xf]
    %v75 = vld [vmem:[%s3 + $0x38] sm:$0xf]
    %v76 = vld [vmem:[%s3 + $0x3c] sm:$0xf]
    %v77 = vld [vmem:[%s4] sm:$0x1]
    %v79 = vperm.slane %v77, 0
    %v97 = vunpack.c.l.b16 %v61
    %v98 = vunpack.c.l.b16 %v62
    %v99 = vunpack.c.l.b16 %v63
    %v100 = vunpack.c.l.b16 %v64
    %v101 = vunpack.c.l.b16 %v65
    %v102 = vunpack.c.l.b16 %v66
    %v103 = vunpack.c.l.b16 %v67
    %v104 = vunpack.c.l.b16 %v68
    %v105 = vunpack.c.l.b16 %v69
    %v106 = vunpack.c.l.b16 %v70
    %v107 = vunpack.c.l.b16 %v71
    %v108 = vunpack.c.l.b16 %v72
    %v109 = vunpack.c.l.b16 %v73
    %v110 = vunpack.c.l.b16 %v74
    %v111 = vunpack.c.l.b16 %v75
    %v112 = vunpack.c.l.b16 %v76
    %v113 = vpack.c.b16 %v98, %v97
    %v114 = vpack.c.b16 %v100, %v99
    %v115 = vpack.c.b16 %v102, %v101
    %v116 = vpack.c.b16 %v104, %v103
    %v117 = vpack.c.b16 %v106, %v105
    %v118 = vpack.c.b16 %v108, %v107
    %v119 = vpack.c.b16 %v110, %v109
    %v120 = vpack.c.b16 %v112, %v111
    %129 = vmatpush.bf16.msra.mxu0 %v120
    %130 = vmatpush.bf16.msra.mxu0 %v119
    %131 = vmatpush.bf16.msra.mxu0 %v118
    %132 = vmatpush.bf16.msra.mxu0 %v117
    %133 = vmatpush.bf16.msra.mxu0 %v116
    %134 = vmatpush.bf16.msra.mxu0 %v115
    %135 = vmatpush.bf16.msra.mxu0 %v114
    %136 = vmatpush.bf16.msra.mxu0 %v113
    %137 = vmatmul.bf16.gmra.mxu0 %v60
    %v138 = vpop.f32.mrf.mxu0
    %v139 = vadd.f32 %v79, %v138
    %v140 = vpop.f32.mrf.mxu0
    %141 = vdwg.mxu0
    %v142 = vmax.f32 %v139, 0.0
    %v143 = vpack.c.bf16 %v142, %v142
    %v144 = vld [vmem:[%s5] sm:$0xf]
    %v145 = vld [vmem:[%s5 + $0x4] sm:$0xf]
    %v146 = vld [vmem:[%s5 + $0x8] sm:$0xf]
    %v147 = vld [vmem:[%s5 + $0xc] sm:$0xf]
    %v148 = vld [vmem:[%s5 + $0x10] sm:$0xf]
    %v149 = vld [vmem:[%s5 + $0x14] sm:$0xf]
    %v150 = vld [vmem:[%s5 + $0x18] sm:$0xf]
    %v151 = vld [vmem:[%s5 + $0x1c] sm:$0xf]
    %v152 = vld [vmem:[%s5 + $0x20] sm:$0xf]
    %v153 = vld [vmem:[%s5 + $0x24] sm:$0xf]
    %v154 = vld [vmem:[%s5 + $0x28] sm:$0xf]
    %v155 = vld [vmem:[%s5 + $0x2c] sm:$0xf]
    %v156 = vld [vmem:[%s5 + $0x30] sm:$0xf]
    %v157 = vld [vmem:[%s5 + $0x34] sm:$0xf]
    %v158 = vld [vmem:[%s5 + $0x38] sm:$0xf]
    %v159 = vld [vmem:[%s5 + $0x3c] sm:$0xf]
    %v160 = vld [vmem:[%s6] sm:$0x1]
    %v162 = vperm.slane %v160, 0
    %v180 = vunpack.c.l.b16 %v144
    %v181 = vunpack.c.l.b16 %v145
    %v182 = vunpack.c.l.b16 %v146
    %v183 = vunpack.c.l.b16 %v147
    %v184 = vunpack.c.l.b16 %v148
    %v185 = vunpack.c.l.b16 %v149
    %v186 = vunpack.c.l.b16 %v150
    %v187 = vunpack.c.l.b16 %v151
    %v188 = vunpack.c.l.b16 %v152
    %v189 = vunpack.c.l.b16 %v153
    %v190 = vunpack.c.l.b16 %v154
    %v191 = vunpack.c.l.b16 %v155
    %v192 = vunpack.c.l.b16 %v156
    %v193 = vunpack.c.l.b16 %v157
    %v194 = vunpack.c.l.b16 %v158
    %v195 = vunpack.c.l.b16 %v159
    %v196 = vpack.c.b16 %v181, %v180
    %v197 = vpack.c.b16 %v183, %v182
    %v198 = vpack.c.b16 %v185, %v184
    %v199 = vpack.c.b16 %v187, %v186
    %v200 = vpack.c.b16 %v189, %v188
    %v201 = vpack.c.b16 %v191, %v190
    %v202 = vpack.c.b16 %v193, %v192
    %v203 = vpack.c.b16 %v195, %v194
    %212 = vmatpush.bf16.msra.mxu0 %v203
    %213 = vmatpush.bf16.msra.mxu0 %v202
    %214 = vmatpush.bf16.msra.mxu0 %v201
    %215 = vmatpush.bf16.msra.mxu0 %v200
    %216 = vmatpush.bf16.msra.mxu0 %v199
    %217 = vmatpush.bf16.msra.mxu0 %v198
    %218 = vmatpush.bf16.msra.mxu0 %v197
    %219 = vmatpush.bf16.msra.mxu0 %v196
    %220 = vmatmul.bf16.gmra.mxu0 %v143
    %v221 = vpop.f32.mrf.mxu0
    %v222 = vadd.f32 %v162, %v221
    %v223 = vpop.f32.mrf.mxu0
    %224 = vdwg.mxu0
    %v225 = vmax.f32 %v222, 0.0
    %vm226 = vcmask 261120
    %227 = vst.msk [vmem:[#allocation2] sm:$0xff] %vm226, %v225
    // Predicated region
    $region30: #{tpu_custom_call.1} parent=1 // pred_check
      _
    $region31: #{tpu_custom_call.1} parent=1 // pred_check_branch
      %229 = sbr.rel (0) target = $region33
    $region32: #{tpu_custom_call.1} parent=1 // pred_region
      %231 = vsyncadd [#allocation3], 0
      %s233 = sshll.u32 [#allocation2], 4
      %s234 = int_to_ptr.vmem [resolvable:$true] %s233
      %s235 = sshll.u32 %s7, 4
      %s236 = int_to_ptr.hbm [resolvable:$true] %s235
      %238 = dma.vmem_to_hbm [thread:$0]  %s234, 128, %s236, [#allocation3]
    $region33: #{tpu_custom_call.1} parent=1 // pred_fallthru
      _
    // Predicated region
    $region34: #{tpu_custom_call.1} parent=1 // pred_check
      _
    $region35: #{tpu_custom_call.1} parent=1 // pred_check_branch
      %240 = sbr.rel (0) target = $region37
    $region36: #{tpu_custom_call.1} parent=1 // pred_region
      %242 = dma.done [#allocation3], 128
    $region37: #{tpu_custom_call.1} parent=1 // pred_fallthru
      _
    %243 = vsyncpa [#allocation3], 1

</llo_original>
